<compile_context>
chip_gen: v5e
topology: v5e:2x2
jax: 0.10.0
libtpu: 0.0.40
codegen_flags: <defaults>
</compile_context>

<pallas_src>
import functools
import math

import numpy as np
import jax
import jax.numpy as jnp
from jax.experimental import pallas as pl
from jax.experimental.pallas import tpu as pltpu


_VMEM_LIMIT = 64 * 1024 * 1024


# ==========================================================================
# layout helpers: NCHW <-> "channels packed along lanes" (B, H, C*W)
# ==========================================================================
def _to_lane(x):
    B, C, H, W = x.shape
    return jnp.transpose(x, (0, 2, 1, 3)).reshape(B, H, C * W)


def _from_lane(x, C):
    B, H, CW = x.shape
    W = CW // C
    return jnp.transpose(x.reshape(B, H, C, W), (0, 2, 1, 3))


# ==========================================================================
# separable bilinear warp (grid_sample) building blocks (used inside kernels)
# ==========================================================================
def _build_warp_mats(dy, dx, src_h, src_w, pad_mode, row_offset=0):
    """dy, dx: (out_r, out_c) f32 pixel displacements for an output-row tile
    starting at absolute row `row_offset`.
    Returns  R   (out_r*out_c, src_h)  row-gather weights
             Cx  (out_r, out_c, src_w) per-output-pixel column weights."""
    f32 = jnp.float32
    out_r, out_c = dy.shape
    oy = (jax.lax.broadcasted_iota(jnp.int32, (out_r, out_c), 0) + row_offset).astype(f32)
    ox = jax.lax.broadcasted_iota(jnp.int32, (out_r, out_c), 1).astype(f32)
    py = oy + dy
    px = ox + dx
    if pad_mode == "border":
        py = jnp.clip(py, 0.0, float(src_h - 1))
        px = jnp.clip(px, 0.0, float(src_w - 1))
    y0 = jnp.floor(py)
    x0 = jnp.floor(px)
    fy = py - y0
    fx = px - x0
    y0i = y0.astype(jnp.int32)
    x0i = x0.astype(jnp.int32)
    y1i = y0i + 1
    x1i = x0i + 1
    wy0 = 1.0 - fy
    wy1 = fy
    wx0 = 1.0 - fx
    wx1 = fx
    if pad_mode == "zeros":
        wy0 = wy0 * ((y0i >= 0) & (y0i < src_h)).astype(f32)
        wy1 = wy1 * ((y1i >= 0) & (y1i < src_h)).astype(f32)
        wx0 = wx0 * ((x0i >= 0) & (x0i < src_w)).astype(f32)
        wx1 = wx1 * ((x1i >= 0) & (x1i < src_w)).astype(f32)
    y0c = jnp.clip(y0i, 0, src_h - 1)
    y1c = jnp.clip(y1i, 0, src_h - 1)
    x0c = jnp.clip(x0i, 0, src_w - 1)
    x1c = jnp.clip(x1i, 0, src_w - 1)

    hh = jax.lax.broadcasted_iota(jnp.int32, (out_r, out_c, src_h), 2)
    R = (wy0[..., None] * (hh == y0c[..., None]).astype(f32)
         + wy1[..., None] * (hh == y1c[..., None]).astype(f32))
    R = R.reshape(out_r * out_c, src_h)

    ww = jax.lax.broadcasted_iota(jnp.int32, (out_r, out_c, src_w), 2)
    Cx = (wx0[..., None] * (ww == x0c[..., None]).astype(f32)
          + wx1[..., None] * (ww == x1c[..., None]).astype(f32))
    return R, Cx


def _warp_packed(img2, R, cpack, W, n_ch, out_rows):
    """img2: (src_h, n_ch*W) channels packed along lanes.
    R: (out_rows*W, src_h).  cpack: (out_rows, W, n_ch*W) column weights tiled
    to full lane width.  Returns (out_rows, n_ch*W) lane-packed warped field."""
    # Row gather on the MXU (M = out_rows*W, large; MXU has slack here).
    rows = jnp.dot(R, img2, preferred_element_type=jnp.float32)        # (oR*W, n_ch*W)
    rows3 = rows.reshape(out_rows, W, n_ch * W)
    prod = cpack * rows3                                               # full-width VPU
    if n_ch == 1:
        return jnp.sum(prod, axis=-1)                                  # (oR, W)
    if n_ch == 2:
        # Segment sums with no unaligned lane slice: ch1 = total - ch0.
        tot = jnp.sum(prod, axis=-1)                                   # (oR, W)
        ch0 = jnp.sum(prod[:, :, :W], axis=-1)                         # aligned half
        return jnp.concatenate([ch0, tot - ch0], axis=-1)              # (oR, 2W)
    # generic (cold path): cumulative prefix sums
    segs = []
    prev = jnp.zeros((out_rows, W), jnp.float32)
    for c in range(1, n_ch):
        cur = jnp.sum(prod[:, :, : c * W], axis=-1)
        segs.append(cur - prev)
        prev = cur
    segs.append(jnp.sum(prod, axis=-1) - prev)
    return jnp.concatenate(segs, axis=-1)


# ==========================================================================
# Pallas kernel 1: fused iterative DDF composition (the j-loop of
# _random_ddf_generate).  grid = (B, ceil(T/U)); U steps unrolled per grid step.
# ==========================================================================
def _compose_kernel(flags_ref,                       # SMEM (B*t_pad*2,) int32
                    dvf_ref, noise_ref,              # (H, 2W) per-batch blocks
                    ddf0_ref, dddf0_ref,             # (H, 2W) initial state
                    ddf_ref, dddf_ref,               # (H, 2W) VMEM-resident outputs
                    dvf0_sc, r0_sc, c0_sc, r1_sc, c1_sc,
                    *, H, W, pad_mode, unroll, t_pad):
    b = pl.program_id(0)
    jblk = pl.program_id(1)

    @pl.when(jblk == 0)
    def _init():
        ddf_ref[...] = ddf0_ref[...]
        dddf_ref[...] = dddf0_ref[...]
        d1 = dvf_ref[...]                                              # (H, 2W)
        R1, C1 = _build_warp_mats(d1[:, :W], d1[:, W:], H, W, pad_mode)
        r1_sc[...] = R1
        c1_sc[...] = jnp.concatenate([C1, C1], axis=-1)                # pre-tiled to 2W
        # dvf0 = dvf + warp(noise, dvf)
        noise_w = _warp_packed(noise_ref[...], R1, c1_sc[...], W, 2, H)
        d0 = d1 + noise_w
        dvf0_sc[...] = d0
        R0, C0 = _build_warp_mats(d0[:, :W], d0[:, W:], H, W, pad_mode)
        r0_sc[...] = R0
        c0_sc[...] = jnp.concatenate([C0, C0], axis=-1)

    for u in range(unroll):
        j = jblk * unroll + u
        f0 = flags_ref[(b * t_pad + j) * 2]
        f1 = flags_ref[(b * t_pad + j) * 2 + 1]

        # flag == 0  <=>  flow is zero  <=>  identity warp  -> skip entirely.
        @pl.when(f0 > 0)
        def _update_ddf():
            w = _warp_packed(ddf_ref[...], r0_sc[...], c0_sc[...], W, 2, H)
            ddf_ref[...] = dvf0_sc[...] + w                            # full-width store

        @pl.when(f1 > 0)
        def _update_dddf():
            w = _warp_packed(dddf_ref[...], r1_sc[...], c1_sc[...], W, 2, H)
            dddf_ref[...] = dvf_ref[...] + w


def compose_fields(flags, dvf2, noise2, ddf2, dddf2, *, unroll, t_pad, pad_mode):
    """All field tensors in lane layout (B, H, 2W); flags is (B*t_pad*2,) int32."""
    B, H, W2 = dvf2.shape
    W = W2 // 2
    HW = H * W
    num_j = t_pad // unroll
    kern = functools.partial(_compose_kernel, H=H, W=W, pad_mode=pad_mode,
                             unroll=unroll, t_pad=t_pad)
    state_spec = pl.BlockSpec((None, H, W2), lambda b, j, f: (b, 0, 0))
    grid_spec = pltpu.PrefetchScalarGridSpec(
        num_scalar_prefetch=1,
        grid=(B, num_j),
        in_specs=[state_spec] * 4,
        out_specs=[state_spec] * 2,
        scratch_shapes=[
            pltpu.VMEM((H, W2), jnp.float32),      # dvf0            (per batch)
            pltpu.VMEM((HW, H), jnp.float32),      # R for dvf0
            pltpu.VMEM((H, W, W2), jnp.float32),   # Cx for dvf0 (pre-tiled to 2W)
            pltpu.VMEM((HW, H), jnp.float32),      # R for dvf
            pltpu.VMEM((H, W, W2), jnp.float32),   # Cx for dvf  (pre-tiled to 2W)
        ],
    )
    ddf_out, dddf_out = pl.pallas_call(
        kern,
        grid_spec=grid_spec,
        out_shape=(jax.ShapeDtypeStruct((B, H, W2), jnp.float32),
                   jax.ShapeDtypeStruct((B, H, W2), jnp.float32)),
        compiler_params=pltpu.CompilerParams(
            dimension_semantics=("parallel", "arbitrary"),
            vmem_limit_bytes=_VMEM_LIMIT),
    )(flags, dvf2, noise2, ddf2, dddf2)
    return ddf_out, dddf_out


# ==========================================================================
# Pallas kernel 2: STN warp (grid_sample bilinear) for the final image warp,
# tiled over output-row blocks (grid = (B, H // tq)).
# ==========================================================================
def _warp_kernel(img_ref, ddf_ref, o_ref, *, H, W, C, tq, pad_mode):
    q = pl.program_id(1)
    d = ddf_ref[...]                                                   # (tq, 2W)
    R, Cx = _build_warp_mats(d[:, :W], d[:, W:], H, W, pad_mode, row_offset=q * tq)
    cpack = Cx if C == 1 else jnp.concatenate([Cx] * C, axis=-1)       # (tq, W, C*W)
    out = _warp_packed(img_ref[...], R, cpack, W, C, tq)               # (tq, C*W)
    o_ref[...] = out.astype(o_ref.dtype)                               # lane-dense store


def _pick_row_tile(H):
    if H <= 64:
        return H
    for t in (64, 32, 16, 8):
        if H % t == 0:
            return t
    return H


def stn_warp(img, ddf, padding_mode):
    """img: (B, C, H, W), ddf: (B, 2, H, W) pixel displacements."""
    B, C, H, W = img.shape
    img2 = _to_lane(img)                                               # (B, H, C*W)
    ddf2 = _to_lane(ddf)                                               # (B, H, 2*W)
    tq = _pick_row_tile(H)
    kern = functools.partial(_warp_kernel, H=H, W=W, C=C, tq=tq, pad_mode=padding_mode)
    out = pl.pallas_call(
        kern,
        out_shape=jax.ShapeDtypeStruct((B, H, C * W), img.dtype),
        grid=(B, H // tq),
        in_specs=[pl.BlockSpec((None, H, C * W), lambda b, q: (b, 0, 0)),
                  pl.BlockSpec((None, tq, 2 * W), lambda b, q: (b, q, 0))],
        out_specs=pl.BlockSpec((None, tq, C * W), lambda b, q: (b, q, 0)),
        compiler_params=pltpu.CompilerParams(
            dimension_semantics=("parallel", "parallel"),
            vmem_limit_bytes=_VMEM_LIMIT),
    )(img2, ddf2)
    return _from_lane(out, C)


# ==========================================================================
# Pallas kernel 3: fused multi-input separable bilinear resize-and-sum.
#   out[c] = sum_s  Wy_s @ x_s[c] @ WxT_s
# Grid over channels ("parallel", O(nc) VMEM — no kron block-diagonal weights).
# ==========================================================================
def _resize_sum_kernel(*refs, n_scales):
    xs = refs[:n_scales]                     # each (h_s, w_s) per-channel block
    wys = refs[n_scales:2 * n_scales]        # (out_h, h_s), resident
    wxTs = refs[2 * n_scales:3 * n_scales]   # (w_s, out_w), resident
    out_ref = refs[3 * n_scales]             # (out_h, out_w)
    acc = None
    for s in range(n_scales):
        t = jnp.dot(wys[s][...], xs[s][...], preferred_element_type=jnp.float32)
        t = jnp.dot(t, wxTs[s][...], preferred_element_type=jnp.float32)
        acc = t if acc is None else acc + t
    out_ref[...] = acc.astype(out_ref.dtype)


def fused_resize_sum(xs, wys, wxTs, out_h, out_w):
    """xs[s]: (NC, h_s, w_s); wys[s]: (out_h, h_s); wxTs[s]: (w_s, out_w)."""
    NC = xs[0].shape[0]
    S = len(xs)
    kern = functools.partial(_resize_sum_kernel, n_scales=S)
    in_specs = ([pl.BlockSpec((None,) + x.shape[1:], lambda c: (c, 0, 0)) for x in xs]
                + [pl.BlockSpec(w.shape, lambda c: (0, 0)) for w in wys]
                + [pl.BlockSpec(w.shape, lambda c: (0, 0)) for w in wxTs])
    out = pl.pallas_call(
        kern,
        out_shape=jax.ShapeDtypeStruct((NC, out_h, out_w), jnp.float32),
        grid=(NC,),
        in_specs=in_specs,
        out_specs=pl.BlockSpec((None, out_h, out_w), lambda c: (c, 0, 0)),
        compiler_params=pltpu.CompilerParams(
            dimension_semantics=("parallel",),
            vmem_limit_bytes=_VMEM_LIMIT),
    )(*xs, *wys, *wxTs)
    return out                                                         # (NC, out_h, out_w)


# ==========================================================================
# host-side bilinear-resize weights (PyTorch F.interpolate, align_corners=False)
# ==========================================================================
def _resize_weights_np(out_size, in_size, rows=None):
    scale = in_size / out_size
    if rows is None:
        dst = np.arange(out_size, dtype=np.float64)
    else:
        dst = np.arange(rows[0], rows[1], dtype=np.float64)   # crop-aware: kept rows only
    real = np.maximum((dst + 0.5) * scale - 0.5, 0.0)
    i0 = np.minimum(np.floor(real).astype(np.int64), in_size - 1)
    i1 = np.minimum(i0 + 1, in_size - 1)
    lam = (real - i0).astype(np.float32)
    n = dst.shape[0]
    w = np.zeros((n, in_size), dtype=np.float32)
    r = np.arange(n)
    w[r, i0] += (1.0 - lam)
    w[r, i1] += lam
    return w


# ==========================================================================
# DeformDDPM forward (JAX/Pallas)
# ==========================================================================
class DeformDDPM:
    def __init__(self, n_steps=50, image_chw=(1, 16, 16), batch_size=2,
                 img_pad_mode="zeros", ddf_pad_mode="border",
                 v_scale=0.008 / 256, ctl_sz=64):
        self.rec_num = 2
        self.ndims = len(image_chw) - 1           # only the 2-D path is implemented
        self.n_steps = n_steps
        self.v_scale = v_scale
        self.batch_size = batch_size
        self.img_pad_mode = img_pad_mode
        self.ddf_pad_mode = ddf_pad_mode
        self.image_chw = image_chw
        self.img_sz = image_chw[1]
        self.ctl_sz = ctl_sz

        # ---- precomputed resize weights (host numpy -> device constants) ----
        scale_num = min(5, int(math.log2(ctl_sz)) - 2)
        self.ctl_szs = [ctl_sz // 2 ** i for i in range(scale_num)]
        self.nc = 2 * self.batch_size * self.ndims
        self.ms_wys, self.ms_wxTs = [], []
        for c in self.ctl_szs:
            w = _resize_weights_np(ctl_sz, c)                          # (ctl, c)
            self.ms_wys.append(jnp.asarray(w))
            self.ms_wxTs.append(jnp.asarray(w.T))                      # (c, ctl)
        sz = self.img_sz
        lo, hi = sz // 2, sz * 3 // 2
        wf = _resize_weights_np(2 * sz, ctl_sz, rows=(lo, hi))         # (sz, ctl) cropped
        self.final_wy = jnp.asarray(wf * (sz / ctl_sz))                # fold pre-resize scale
        self.final_wxT = jnp.asarray(wf.T)                             # (ctl, sz)

    # ---- schedule (host-side scalar math, as in the PyTorch .item() usage) ----
    def _get_ddf_scale(self, t, divide_num=1, max_ddf_num=200):
        tf = np.asarray(t, dtype=np.float64).reshape(-1)
        rec_num = 1
        mul_num_ddf = np.floor(2.0 * np.power(tf, 1.3) / (3.0 * divide_num))
        mul_num_dvf = np.floor(np.power(tf, 0.6) / divide_num).astype(np.int64)
        mul_num_ddf = np.clip(mul_num_ddf, 1, max_ddf_num).astype(np.int64)
        return rec_num, mul_num_ddf, mul_num_dvf

    # ---- multiscale random velocity fields: one fused Pallas resize-sum call ----
    def _multiscale_pair(self, key, noise_ratio):
        """Returns (dvf, noise, key); dvf/noise in lane layout (B, ctl, 2*ctl)."""
        B, nd, ctl = self.batch_size, self.ndims, self.ctl_sz
        xs = []
        for c in self.ctl_szs:
            key, sub = jax.random.split(key)
            x = jax.random.normal(sub, (2, B, nd, c, c), jnp.float32)
            amp = jnp.asarray([self.v_scale, self.v_scale * noise_ratio],
                              jnp.float32).reshape(2, 1, 1, 1, 1) * (ctl / c)
            xs.append((x * amp).reshape(self.nc, c, c))
        out = fused_resize_sum(xs, self.ms_wys, self.ms_wxTs, ctl, ctl)
        out = out.reshape(2, B, nd, ctl, ctl)
        return _to_lane(out[0]), _to_lane(out[1]), key

    # ---- iterative DDF composition: one fused Pallas call per rec ----
    def _random_ddf_generate(self, key, rec_num, mul_num, noise_ratio=0.08):
        B, nd, ctl, sz = self.batch_size, self.ndims, self.ctl_sz, self.img_sz
        mul0 = np.broadcast_to(np.asarray(mul_num[0]).reshape(-1), (B,)).astype(np.int64)
        mul1 = np.broadcast_to(np.asarray(mul_num[1]).reshape(-1), (B,)).astype(np.int64)
        T = max(int(np.max(mul0)), 1)                 # loop length, as in torch .item()
        unroll = int(min(8, T))
        num_j = -(-T // unroll)
        t_pad = num_j * unroll
        jj = np.arange(t_pad, dtype=np.int64).reshape(1, t_pad)
        flags = np.stack([mul0.reshape(B, 1) > jj, mul1.reshape(B, 1) > jj], axis=-1)
        flags = jnp.asarray(flags.astype(np.int32).reshape(-1))        # (B*t_pad*2,)

        ddf = jnp.zeros((B, ctl, nd * ctl), jnp.float32)               # lane layout (dy|dx)
        dddf = jnp.zeros((B, ctl, nd * ctl), jnp.float32)
        for _ in range(rec_num):
            dvf, noise, key = self._multiscale_pair(key, noise_ratio)
            ddf, dddf = compose_fields(flags, dvf, noise, ddf, dddf,
                                       unroll=unroll, t_pad=t_pad,
                                       pad_mode=self.ddf_pad_mode)

        # final resize (ctl -> 2*img_sz) restricted to the central crop, both fields at once
        both = jnp.concatenate([_from_lane(ddf, nd), _from_lane(dddf, nd)], axis=0)
        both = both.reshape(2 * B * nd, ctl, ctl)
        both = fused_resize_sum([both], [self.final_wy], [self.final_wxT], sz, sz)
        both = both.reshape(2, B, nd, sz, sz)
        return both[0], both[1]                       # (ddf, dddf)

    def _get_random_ddf(self, key, img, t):
        rec_num, mul_ddf, mul_dvf = self._get_ddf_scale(t)
        ddf_forward, dvf_forward = self._random_ddf_generate(
            key, rec_num, [mul_ddf, mul_dvf])
        warped_img = stn_warp(img, ddf_forward, padding_mode=self.img_pad_mode)
        return warped_img, dvf_forward, ddf_forward

    def forward(self, x_0, t, key):
        return self._get_random_ddf(key, img=x_0, t=t)


# --------------------------------------------------------------------------
if __name__ == "__main__":
    key = jax.random.PRNGKey(0)
    k_img, k_ddf = jax.random.split(key)

    B, C, S = 2, 1, 16
    model = DeformDDPM(image_chw=(C, S, S), batch_size=B, ctl_sz=16)

    x0 = jax.random.normal(k_img, (B, C, S, S), jnp.float32)
    t = np.array([3, 5], dtype=np.int64)   # per-sample diffusion step

    warped_img, dvf_forward, ddf_forward = model.forward(x0, t, k_ddf)
    jax.block_until_ready((warped_img, dvf_forward, ddf_forward))

    assert warped_img.shape == (B, C, S, S)
    assert ddf_forward.shape == (B, 2, S, S)
    assert dvf_forward.shape == (B, 2, S, S)
    assert bool(jnp.all(jnp.isfinite(warped_img)))
    assert bool(jnp.all(jnp.isfinite(ddf_forward)))
    assert bool(jnp.all(jnp.isfinite(dvf_forward)))
    print("KERNEL_OK")
</pallas_src>

<mosaic_0001>
module attributes {stable_mosaic.version = 11 : i64} {
  func.func @_resize_sum_kernel(%arg0: i32, %arg1: memref<1x16x16xf32, #tpu.memory_space<vmem>>, %arg2: memref<1x8x8xf32, #tpu.memory_space<vmem>>, %arg3: memref<16x16xf32, #tpu.memory_space<vmem>>, %arg4: memref<16x8xf32, #tpu.memory_space<vmem>>, %arg5: memref<16x16xf32, #tpu.memory_space<vmem>>, %arg6: memref<8x16xf32, #tpu.memory_space<vmem>>, %arg7: memref<1x16x16xf32, #tpu.memory_space<vmem>>) attributes {dimension_semantics = [#tpu.dimension_semantics<parallel>], iteration_bounds = array<i64: 8>, scalar_prefetch = 0 : i64, scratch_operands = 0 : i64, tpu.core_type = #tpu.core_type<tc>, window_params = [{transform_indices = @transform_0, window_bounds = array<i64: 1, 16, 16>}, {transform_indices = @transform_1, window_bounds = array<i64: 1, 8, 8>}, {pipeline_mode = #tpu.pipeline_mode<synchronous>, transform_indices = @transform_2, window_bounds = array<i64: 16, 16>}, {pipeline_mode = #tpu.pipeline_mode<synchronous>, transform_indices = @transform_3, window_bounds = array<i64: 16, 8>}, {pipeline_mode = #tpu.pipeline_mode<synchronous>, transform_indices = @transform_4, window_bounds = array<i64: 16, 16>}, {pipeline_mode = #tpu.pipeline_mode<synchronous>, transform_indices = @transform_5, window_bounds = array<i64: 8, 16>}, {transform_indices = @transform_6, window_bounds = array<i64: 1, 16, 16>}]} {
    %c0 = arith.constant 0 : index
    %c0_0 = arith.constant 0 : index
    %0 = vector.load %arg3[%c0, %c0_0] : memref<16x16xf32, #tpu.memory_space<vmem>>, vector<16x16xf32>
    %c0_1 = arith.constant 0 : index
    %c0_2 = arith.constant 0 : index
    %c0_3 = arith.constant 0 : index
    %1 = vector.load %arg1[%c0_1, %c0_2, %c0_3] : memref<1x16x16xf32, #tpu.memory_space<vmem>>, vector<1x16x16xf32>
    %2 = vector.shape_cast %1 : vector<1x16x16xf32> to vector<16x16xf32>
    %cst = arith.constant dense<0.000000e+00> : vector<16x16xf32>
    %3 = tpu.matmul %0, %2, %cst {dimension_numbers = #tpu.dot_dimension_numbers<[1], [0], [0], [1], [0, 0, 1, 1], [], []>} : vector<16x16xf32>, vector<16x16xf32>, vector<16x16xf32> -> vector<16x16xf32>
    %c0_4 = arith.constant 0 : index
    %c0_5 = arith.constant 0 : index
    %4 = vector.load %arg5[%c0_4, %c0_5] : memref<16x16xf32, #tpu.memory_space<vmem>>, vector<16x16xf32>
    %cst_6 = arith.constant dense<0.000000e+00> : vector<16x16xf32>
    %5 = tpu.matmul %3, %4, %cst_6 {dimension_numbers = #tpu.dot_dimension_numbers<[1], [0], [0], [1], [0, 0, 1, 1], [], []>} : vector<16x16xf32>, vector<16x16xf32>, vector<16x16xf32> -> vector<16x16xf32>
    %c0_7 = arith.constant 0 : index
    %c0_8 = arith.constant 0 : index
    %6 = vector.load %arg4[%c0_7, %c0_8] : memref<16x8xf32, #tpu.memory_space<vmem>>, vector<16x8xf32>
    %c0_9 = arith.constant 0 : index
    %c0_10 = arith.constant 0 : index
    %c0_11 = arith.constant 0 : index
    %7 = vector.load %arg2[%c0_9, %c0_10, %c0_11] : memref<1x8x8xf32, #tpu.memory_space<vmem>>, vector<1x8x8xf32>
    %8 = vector.shape_cast %7 : vector<1x8x8xf32> to vector<8x8xf32>
    %cst_12 = arith.constant dense<0.000000e+00> : vector<16x8xf32>
    %9 = tpu.matmul %6, %8, %cst_12 {dimension_numbers = #tpu.dot_dimension_numbers<[1], [0], [0], [1], [0, 0, 1, 1], [], []>} : vector<16x8xf32>, vector<8x8xf32>, vector<16x8xf32> -> vector<16x8xf32>
    %c0_13 = arith.constant 0 : index
    %c0_14 = arith.constant 0 : index
    %10 = vector.load %arg6[%c0_13, %c0_14] : memref<8x16xf32, #tpu.memory_space<vmem>>, vector<8x16xf32>
    %cst_15 = arith.constant dense<0.000000e+00> : vector<16x16xf32>
    %11 = tpu.matmul %9, %10, %cst_15 {dimension_numbers = #tpu.dot_dimension_numbers<[1], [0], [0], [1], [0, 0, 1, 1], [], []>} : vector<16x8xf32>, vector<8x16xf32>, vector<16x16xf32> -> vector<16x16xf32>
    %12 = arith.addf %5, %11 : vector<16x16xf32>
    %c0_16 = arith.constant 0 : index
    %c0_17 = arith.constant 0 : index
    %c0_18 = arith.constant 0 : index
    %13 = vector.load %arg7[%c0_16, %c0_17, %c0_18] : memref<1x16x16xf32, #tpu.memory_space<vmem>>, vector<1x16x16xf32>
    %14 = vector.shape_cast %13 : vector<1x16x16xf32> to vector<16x16xf32>
    %15 = vector.shape_cast %12 : vector<16x16xf32> to vector<1x16x16xf32>
    tpu.vector_store %arg7[%c0_16, %c0_17, %c0_18], %15 {strides = array<i32>} : memref<1x16x16xf32, #tpu.memory_space<vmem>>, vector<1x16x16xf32>,
    return
  }
  func.func @transform_0(%arg0: i32) -> (i32, i32, i32) {
    %c0_i32 = arith.constant 0 : i32
    %c0_i32_0 = arith.constant 0 : i32
    %c0_i32_1 = arith.constant 0 : i32
    return %arg0, %c0_i32, %c0_i32_0 : i32, i32, i32
  }
  func.func @transform_1(%arg0: i32) -> (i32, i32, i32) {
    %c0_i32 = arith.constant 0 : i32
    %c0_i32_0 = arith.constant 0 : i32
    %c0_i32_1 = arith.constant 0 : i32
    return %arg0, %c0_i32, %c0_i32_0 : i32, i32, i32
  }
  func.func @transform_2(%arg0: i32) -> (i32, i32) {
    %c0_i32 = arith.constant 0 : i32
    %c0_i32_0 = arith.constant 0 : i32
    %c0_i32_1 = arith.constant 0 : i32
    return %c0_i32, %c0_i32_0 : i32, i32
  }
  func.func @transform_3(%arg0: i32) -> (i32, i32) {
    %c0_i32 = arith.constant 0 : i32
    %c0_i32_0 = arith.constant 0 : i32
    %c0_i32_1 = arith.constant 0 : i32
    return %c0_i32, %c0_i32_0 : i32, i32
  }
  func.func @transform_4(%arg0: i32) -> (i32, i32) {
    %c0_i32 = arith.constant 0 : i32
    %c0_i32_0 = arith.constant 0 : i32
    %c0_i32_1 = arith.constant 0 : i32
    return %c0_i32, %c0_i32_0 : i32, i32
  }
  func.func @transform_5(%arg0: i32) -> (i32, i32) {
    %c0_i32 = arith.constant 0 : i32
    %c0_i32_0 = arith.constant 0 : i32
    %c0_i32_1 = arith.constant 0 : i32
    return %c0_i32, %c0_i32_0 : i32, i32
  }
  func.func @transform_6(%arg0: i32) -> (i32, i32, i32) {
    %c0_i32 = arith.constant 0 : i32
    %c0_i32_0 = arith.constant 0 : i32
    %c0_i32_1 = arith.constant 0 : i32
    return %arg0, %c0_i32, %c0_i32_0 : i32, i32, i32
  }
}

</mosaic_0001>

<llo_original>
// kernel: tpu_custom_call.1
$region0: #{tpu_custom_call.1}
  #allocation0 [shape = 'u32[]', space=smem, size = 0x4, offset = 0x4, fixed_abs, tag = 'smem constant byte address 0x4 - core index']
  #allocation1 [shape = 'u32[72,128]{1,0:T(1,128)}', space=vmem, size = 0x9000, scoped, tag = 'internal scratch']
  %s0 = inlined_call_operand.hbm [shape: f32[8,16,16], index: 0, kind: input, shape index: {}]
  %s1 = inlined_call_operand.hbm [shape: f32[8,8,8], index: 1, kind: input, shape index: {}]
  %s2 = inlined_call_operand.vmem [shape: f32[16,16], index: 2, kind: input, shape index: {}]
  %s3 = inlined_call_operand.vmem [shape: f32[16,8], index: 3, kind: input, shape index: {}]
  %s4 = inlined_call_operand.hbm [shape: f32[16,16], index: 4, kind: input, shape index: {}]
  %s5 = inlined_call_operand.vmem [shape: f32[8,16], index: 5, kind: input, shape index: {}]
  %s6 = inlined_call_operand.hbm [shape: f32[8,16,16], index: 6, kind: output, shape index: {}]
  %s7 = sld [smem:[#allocation0]]
  $region69: #{tpu_custom_call.1} parent=0
    _
  %s9 = ssub.s32 1, %s7
  %s10 = scalar_select 0, %s9, %s7
  $region1: #{tpu_custom_call.1} parent=0
    #allocation2 [shape = 'u8[16384]{0}', space=vmem, size = 0x4000, scoped, tag = 'input window, operand 0']
    #allocation3 [shape = 's32[2]{0}', space=sflag, size = 0x8, scoped, tag = 'scoped memory for tpu_custom_call.1']
    #allocation4 [shape = 's32[2]{0}', space=sflag, size = 0x8, scoped, tag = 'scoped memory for tpu_custom_call.1']
    #allocation5 [shape = 'u8[8192]{0}', space=vmem, size = 0x2000, scoped, tag = 'input window, operand 1']
    #allocation6 [shape = 's32[2]{0}', space=sflag, size = 0x8, scoped, tag = 'scoped memory for tpu_custom_call.1']
    #allocation7 [shape = 'u8[8192]{0}', space=vmem, size = 0x2000, scoped, tag = 'input window, operand 4, single buffered']
    #allocation8 [shape = 'u8[16384]{0}', space=vmem, size = 0x4000, scoped, tag = 'output window, operand 0']
    %11 = vsyncpa [#allocation3], 0
    %s12 = scalar_lea.sflag [#allocation3], 1
    %13 = vsyncpa %s12, 0
    %14 = vsyncpa [#allocation6], 0
    %s15 = scalar_lea.sflag [#allocation6], 1
    %16 = vsyncpa %s15, 0
    %17 = vsyncpa [#allocation4], 0
    %s18 = scalar_lea.sflag [#allocation4], 1
    %19 = vsyncpa %s18, 0
    loop: start=0, step=1, limit=10
    $region2: #{tpu_custom_call.1} parent=1 // loop_pre_header
      _
    $region3: #{tpu_custom_call.1} parent=1 // loop_header
      %s21 = sphi 0, %s25
      %p22 = scmp.ge.s32.totalorder %s21, 10
      %s31 = sphi 0, %s33
      %s34 = sphi 0, %s31
      %s35 = sphi 0, %s34
      %s51 = sphi 0, %s35
      %s57 = sphi 0, %s59
      %s60 = sphi 0, %s57
      %s61 = sphi 0, %s60
      %s77 = sphi 0, %s61
      %s81 = sphi 0, %s81
      %s83 = sphi 0, %s81
      %s84 = sphi 0, %s83
      %s98 = sphi 0, %s84
      %s102 = sphi 0, %s102
      %s104 = sphi 0, %s102
      %s105 = sphi 0, %s104
      %s119 = sphi 0, %s105
      %s123 = sphi 0, %s123
      %s125 = sphi 0, %s123
      %s126 = sphi 0, %s125
      %s140 = sphi 0, %s126
      %s144 = sphi 0, %s144
      %s146 = sphi 0, %s144
      %s147 = sphi 0, %s146
      %s161 = sphi 0, %s147
      %s167 = sphi 0, %s169
      %s170 = sphi 0, %s167
      %s171 = sphi 0, %s170
      %s187 = sphi 0, %s171
    $region4: #{tpu_custom_call.1} parent=1 // loop_header_branch
      %24 = sbr.rel (%p22) target = $region8
    $region5: #{tpu_custom_call.1} parent=1 // loop_body
      %s26 = ssub.s32 %s21, 1
      %s27 = ssub.s32 %s21, 2
      %s28 = sadd.s32 %s21, 1
      %s29 = ssub.s32 %s21, %s28
      %p30 = scmp.eq.s32.totalorder %s29, 0
      %s32 = sadd.s32 %s31, 1
      %s33 = scalar_select %p30, %s31, %s32
      %p36 = pneg %p30
      %p37 = scmp.eq.s32.totalorder %s21, 7
      %p38 = por %p36, %p37
      %p39 = scmp.ne.s32.totalorder %s31, %s34
      %p40 = scmp.eq.s32.totalorder %s21, 0
      %p41 = por %p39, %p40
      %p42 = scmp.ne.s32.totalorder %s31, %s34
      %p43 = scmp.eq.s32.totalorder %s26, 7
      %p44 = por %p42, %p43
      %p45 = scmp.ne.s32.totalorder %s34, %s35
      %p46 = scmp.eq.s32.totalorder %s26, 0
      %p47 = por %p45, %p46
      %p48 = scmp.ne.s32.totalorder %s34, %s35
      %p49 = scmp.eq.s32.totalorder %s27, 7
      %p50 = por %p48, %p49
      %p52 = scmp.ne.s32.totalorder %s35, %s51
      %p53 = scmp.eq.s32.totalorder %s27, 0
      %p54 = por %p52, %p53
      %s55 = ssub.s32 %s21, %s28
      %p56 = scmp.eq.s32.totalorder %s55, 0
      %s58 = sadd.s32 %s57, 1
      %s59 = scalar_select %p56, %s57, %s58
      %p62 = pneg %p56
      %p63 = scmp.eq.s32.totalorder %s21, 7
      %p64 = por %p62, %p63
      %p65 = scmp.ne.s32.totalorder %s57, %s60
      %p66 = scmp.eq.s32.totalorder %s21, 0
      %p67 = por %p65, %p66
      %p68 = scmp.ne.s32.totalorder %s57, %s60
      %p69 = scmp.eq.s32.totalorder %s26, 7
      %p70 = por %p68, %p69
      %p71 = scmp.ne.s32.totalorder %s60, %s61
      %p72 = scmp.eq.s32.totalorder %s26, 0
      %p73 = por %p71, %p72
      %p74 = scmp.ne.s32.totalorder %s60, %s61
      %p75 = scmp.eq.s32.totalorder %s27, 7
      %p76 = por %p74, %p75
      %p78 = scmp.ne.s32.totalorder %s61, %s77
      %p79 = scmp.eq.s32.totalorder %s27, 0
      %p80 = por %p78, %p79
      %s82 = sadd.s32 %s81, 1
      %p85 = scmp.eq.s32.totalorder %s21, 7
      %p86 = scmp.ne.s32.totalorder %s81, %s83
      %p87 = scmp.eq.s32.totalorder %s21, 0
      %p88 = por %p86, %p87
      %p89 = scmp.ne.s32.totalorder %s81, %s83
      %p90 = scmp.eq.s32.totalorder %s26, 7
      %p91 = por %p89, %p90
      %p92 = scmp.ne.s32.totalorder %s83, %s84
      %p93 = scmp.eq.s32.totalorder %s26, 0
      %p94 = por %p92, %p93
      %p95 = scmp.ne.s32.totalorder %s83, %s84
      %p96 = scmp.eq.s32.totalorder %s27, 7
      %p97 = por %p95, %p96
      %p99 = scmp.ne.s32.totalorder %s84, %s98
      %p100 = scmp.eq.s32.totalorder %s27, 0
      %p101 = por %p99, %p100
      %s103 = sadd.s32 %s102, 1
      %p106 = scmp.eq.s32.totalorder %s21, 7
      %p107 = scmp.ne.s32.totalorder %s102, %s104
      %p108 = scmp.eq.s32.totalorder %s21, 0
      %p109 = por %p107, %p108
      %p110 = scmp.ne.s32.totalorder %s102, %s104
      %p111 = scmp.eq.s32.totalorder %s26, 7
      %p112 = por %p110, %p111
      %p113 = scmp.ne.s32.totalorder %s104, %s105
      %p114 = scmp.eq.s32.totalorder %s26, 0
      %p115 = por %p113, %p114
      %p116 = scmp.ne.s32.totalorder %s104, %s105
      %p117 = scmp.eq.s32.totalorder %s27, 7
      %p118 = por %p116, %p117
      %p120 = scmp.ne.s32.totalorder %s105, %s119
      %p121 = scmp.eq.s32.totalorder %s27, 0
      %p122 = por %p120, %p121
      %s124 = sadd.s32 %s123, 1
      %p127 = scmp.eq.s32.totalorder %s21, 7
      %p128 = scmp.ne.s32.totalorder %s123, %s125
      %p129 = scmp.eq.s32.totalorder %s21, 0
      %p130 = por %p128, %p129
      %p131 = scmp.ne.s32.totalorder %s123, %s125
      %p132 = scmp.eq.s32.totalorder %s26, 7
      %p133 = por %p131, %p132
      %p134 = scmp.ne.s32.totalorder %s125, %s126
      %p135 = scmp.eq.s32.totalorder %s26, 0
      %p136 = por %p134, %p135
      %p137 = scmp.ne.s32.totalorder %s125, %s126
      %p138 = scmp.eq.s32.totalorder %s27, 7
      %p139 = por %p137, %p138
      %p141 = scmp.ne.s32.totalorder %s126, %s140
      %p142 = scmp.eq.s32.totalorder %s27, 0
      %p143 = por %p141, %p142
      %s145 = sadd.s32 %s144, 1
      %p148 = scmp.eq.s32.totalorder %s21, 7
      %p149 = scmp.ne.s32.totalorder %s144, %s146
      %p150 = scmp.eq.s32.totalorder %s21, 0
      %p151 = por %p149, %p150
      %p152 = scmp.ne.s32.totalorder %s144, %s146
      %p153 = scmp.eq.s32.totalorder %s26, 7
      %p154 = por %p152, %p153
      %p155 = scmp.ne.s32.totalorder %s146, %s147
      %p156 = scmp.eq.s32.totalorder %s26, 0
      %p157 = por %p155, %p156
      %p158 = scmp.ne.s32.totalorder %s146, %s147
      %p159 = scmp.eq.s32.totalorder %s27, 7
      %p160 = por %p158, %p159
      %p162 = scmp.ne.s32.totalorder %s147, %s161
      %p163 = scmp.eq.s32.totalorder %s27, 0
      %p164 = por %p162, %p163
      %s165 = ssub.s32 %s21, %s28
      %p166 = scmp.eq.s32.totalorder %s165, 0
      %s168 = sadd.s32 %s167, 1
      %s169 = scalar_select %p166, %s167, %s168
      %p172 = pneg %p166
      %p173 = scmp.eq.s32.totalorder %s21, 7
      %p174 = por %p172, %p173
      %p175 = scmp.ne.s32.totalorder %s167, %s170
      %p176 = scmp.eq.s32.totalorder %s21, 0
      %p177 = por %p175, %p176
      %p178 = scmp.ne.s32.totalorder %s167, %s170
      %p179 = scmp.eq.s32.totalorder %s26, 7
      %p180 = por %p178, %p179
      %p181 = scmp.ne.s32.totalorder %s170, %s171
      %p182 = scmp.eq.s32.totalorder %s26, 0
      %p183 = por %p181, %p182
      %p184 = scmp.ne.s32.totalorder %s170, %s171
      %p185 = scmp.eq.s32.totalorder %s27, 7
      %p186 = por %p184, %p185
      %p188 = scmp.ne.s32.totalorder %s171, %s187
      %p189 = scmp.eq.s32.totalorder %s27, 0
      %p190 = por %p188, %p189
      %p191 = scmp.le.s32.totalorder 1, %s21
      %p192 = scmp.lt.s32.totalorder %s21, 9
      %p193 = pnand %p191, %p192
      %p194 = pneg %p193
      // Predicated region
      $region9: #{tpu_custom_call.1} parent=5 // pred_check
        _
      $region10: #{tpu_custom_call.1} parent=5 // pred_check_branch
        %196 = sbr.rel (%p193) target = $region12
      $region11: #{tpu_custom_call.1} parent=5 // pred_region
        %s197 = ssub.s32 %s21, 1
        // Predicated region
        $region13: #{tpu_custom_call.1} parent=11 // pred_check
          %p198 = pneg %p94
        $region14: #{tpu_custom_call.1} parent=11 // pred_check_branch
          %200 = sbr.rel (%p198) target = $region16
        $region15: #{tpu_custom_call.1} parent=11 // pred_region
          _
        $region16: #{tpu_custom_call.1} parent=11 // pred_fallthru
          _
        // Predicated region
        $region17: #{tpu_custom_call.1} parent=11 // pred_check
          %p201 = pneg %p115
        $region18: #{tpu_custom_call.1} parent=11 // pred_check_branch
          %203 = sbr.rel (%p201) target = $region20
        $region19: #{tpu_custom_call.1} parent=11 // pred_region
          _
        $region20: #{tpu_custom_call.1} parent=11 // pred_fallthru
          _
        // Predicated region
        $region21: #{tpu_custom_call.1} parent=11 // pred_check
          %p204 = pneg %p136
        $region22: #{tpu_custom_call.1} parent=11 // pred_check_branch
          %206 = sbr.rel (%p204) target = $region24
        $region23: #{tpu_custom_call.1} parent=11 // pred_region
          %208 = vsyncadd [#allocation6], 0
          %s209 = sshll.u32 %s4, 4
          %s210 = int_to_ptr.hbm [resolvable:$true] %s209
          %s211 = sshll.u32 [#allocation7], 4
          %s212 = int_to_ptr.vmem [resolvable:$true] %s211
          %217 = dma.hbm_to_vmem [thread:$0]  %s210, 256, %s212, [#allocation6], 128, 128, 8
        $region24: #{tpu_custom_call.1} parent=11 // pred_fallthru
          _
        // Predicated region
        $region25: #{tpu_custom_call.1} parent=11 // pred_check
          %p218 = pneg %p157
        $region26: #{tpu_custom_call.1} parent=11 // pred_check_branch
          %220 = sbr.rel (%p218) target = $region28
        $region27: #{tpu_custom_call.1} parent=11 // pred_region
          _
        $region28: #{tpu_custom_call.1} parent=11 // pred_fallthru
          _
      $region12: #{tpu_custom_call.1} parent=5 // pred_fallthru
        _
      %p221 = scmp.lt.s32.totalorder %s21, 8
      // Predicated region
      $region29: #{tpu_custom_call.1} parent=5 // pred_check
        %p222 = pneg %p221
      $region30: #{tpu_custom_call.1} parent=5 // pred_check_branch
        %224 = sbr.rel (%p222) target = $region32
      $region31: #{tpu_custom_call.1} parent=5 // pred_region
        // Predicated region
        $region33: #{tpu_custom_call.1} parent=31 // pred_check
          %p225 = pneg %p41
        $region34: #{tpu_custom_call.1} parent=31 // pred_check_branch
          %227 = sbr.rel (%p225) target = $region36
        $region35: #{tpu_custom_call.1} parent=31 // pred_region
          %s228 = sand.u32 %s31, 1
          %s229 = scalar_lea.sflag [#allocation3], %s228
          %s230 = sand.u32 %s31, 1
          %s231 = smul.addr %s230, 16
          %s232 = scalar_lea.vmem [#allocation2], %s231
          %234 = vsyncadd %s229, 0
          %s235 = smul.addr %s21, 2
          %s236 = smul.addr %s235, 8
          %s237 = scalar_lea.hbm %s0, %s236
          %s238 = sshll.u32 %s237, 4
          %s239 = int_to_ptr.hbm [resolvable:$true] %s238
          %s240 = sshll.u32 %s232, 4
          %s241 = int_to_ptr.vmem [resolvable:$true] %s240
          %246 = dma.hbm_to_vmem [thread:$0]  %s239, 256, %s241, %s229, 128, 128, 8
        $region36: #{tpu_custom_call.1} parent=31 // pred_fallthru
          _
        // Predicated region
        $region37: #{tpu_custom_call.1} parent=31 // pred_check
          %p247 = pneg %p67
        $region38: #{tpu_custom_call.1} parent=31 // pred_check_branch
          %249 = sbr.rel (%p247) target = $region40
        $region39: #{tpu_custom_call.1} parent=31 // pred_region
          %s250 = sand.u32 %s21, 1
          %s251 = scalar_lea.sflag [#allocation6], %s250
          %s252 = sand.u32 %s57, 1
          %s253 = smul.addr %s252, 8
          %s254 = scalar_lea.vmem [#allocation5], %s253
          %256 = vsyncadd %s251, 0
          %s257 = smul.addr %s21, 8
          %s258 = scalar_lea.hbm %s1, %s257
          %s260 = sshll.u32 %s258, 4
          %s261 = int_to_ptr.hbm [resolvable:$true] %s260
          %s262 = sshll.u32 %s254, 4
          %s263 = int_to_ptr.vmem [resolvable:$true] %s262
          %265 = dma.hbm_to_vmem [thread:$0]  %s261, 128, %s263, %s251
        $region40: #{tpu_custom_call.1} parent=31 // pred_fallthru
          _
      $region32: #{tpu_custom_call.1} parent=5 // pred_fallthru
        _
      %p266 = scmp.le.s32.totalorder 1, %s21
      %p267 = scmp.lt.s32.totalorder %s21, 9
      %p268 = pnand %p266, %p267
      %p269 = pneg %p268
      // Predicated region
      $region41: #{tpu_custom_call.1} parent=5 // pred_check
        _
      $region42: #{tpu_custom_call.1} parent=5 // pred_check_branch
        %271 = sbr.rel (%p268) target = $region44
      $region43: #{tpu_custom_call.1} parent=5 // pred_region
        %s272 = ssub.s32 %s21, 1
        %s273 = sand.u32 %s34, 1
        %s274 = scalar_lea.sflag [#allocation3], %s273
        %s275 = sand.u32 %s34, 1
        %s276 = smul.addr %s275, 16
        %s277 = scalar_lea.vmem [#allocation2], %s276
        // Predicated region
        $region45: #{tpu_custom_call.1} parent=43 // pred_check
          %p278 = pneg %p47
        $region46: #{tpu_custom_call.1} parent=43 // pred_check_branch
          %280 = sbr.rel (%p278) target = $region48
        $region47: #{tpu_custom_call.1} parent=43 // pred_region
          %282 = dma.done %s274, 256
        $region48: #{tpu_custom_call.1} parent=43 // pred_fallthru
          _
        %s283 = sand.u32 %s26, 1
        %s284 = scalar_lea.sflag [#allocation6], %s283
        %s285 = sand.u32 %s60, 1
        %s286 = smul.addr %s285, 8
        %s287 = scalar_lea.vmem [#allocation5], %s286
        // Predicated region
        $region49: #{tpu_custom_call.1} parent=43 // pred_check
          %p288 = pneg %p73
        $region50: #{tpu_custom_call.1} parent=43 // pred_check_branch
          %290 = sbr.rel (%p288) target = $region52
        $region51: #{tpu_custom_call.1} parent=43 // pred_region
          %292 = dma.done %s284, 128
        $region52: #{tpu_custom_call.1} parent=43 // pred_fallthru
          _
        // Predicated region
        $region53: #{tpu_custom_call.1} parent=43 // pred_check
          %p293 = pneg %p136
        $region54: #{tpu_custom_call.1} parent=43 // pred_check_branch
          %295 = sbr.rel (%p293) target = $region56
        $region55: #{tpu_custom_call.1} parent=43 // pred_region
          %297 = dma.done [#allocation6], 256
        $region56: #{tpu_custom_call.1} parent=43 // pred_fallthru
          _
        %s298 = sand.u32 %s34, 1
        %s299 = scalar_lea.sflag [#allocation3], %s298
        %s300 = sand.u32 %s34, 1
        %s301 = smul.addr %s300, 16
        %s302 = scalar_lea.vmem [#allocation2], %s301
        %p303 = pneg %p47
        %p304 = pneg %p44
        %s305 = sand.u32 %s26, 1
        %s306 = scalar_lea.sflag [#allocation6], %s305
        %s307 = sand.u32 %s60, 1
        %s308 = smul.addr %s307, 8
        %s309 = scalar_lea.vmem [#allocation5], %s308
        %p310 = pneg %p73
        %p311 = pneg %p70
        %p312 = pneg %p94
        %p313 = pneg %p91
        %p314 = pneg %p115
        %p315 = pneg %p112
        %p316 = pneg %p136
        %p317 = pneg %p133
        %p318 = pneg %p157
        %p319 = pneg %p154
        %p320 = pneg %p183
        %p321 = pneg %p180
        %s322 = sand.u32 %s170, 1
        %s323 = scalar_lea.sflag [#allocation4], %s322
        %s324 = sand.u32 %s170, 1
        %s325 = smul.addr %s324, 16
        %s326 = scalar_lea.vmem [#allocation8], %s325
        %v327 = vld [vmem:[%s2] sm:$0xff]
        %v328 = vld [vmem:[%s2 + $0x8] sm:$0xff]
        %v329 = vld [vmem:[%s277] sm:$0xff]
        %v330 = vld [vmem:[%s277 + $0x8] sm:$0xff]
        %vm331 = vcmask 130048
        %v333 = vsel %vm331, %v327, 0
        %v336 = vsel %vm331, %v328, 0
        %338 = vmatpush.msra.mxu0 0.0
        %339 = vmatpush.msra.mxu0 0.0
        %340 = vmatpush.msra.mxu0 0.0
        %341 = vmatpush.msra.mxu0 0.0
        %342 = vmatpush.msra.mxu0 0.0
        %343 = vmatpush.msra.mxu0 0.0
        %344 = vmatpush.msra.mxu0 0.0
        %345 = vmatpush.msra.mxu0 0.0
        %346 = vmatpush.msra.mxu0 0.0
        %347 = vmatpush.msra.mxu0 0.0
        %348 = vmatpush.msra.mxu0 0.0
        %349 = vmatpush.msra.mxu0 0.0
        %350 = vmatpush.msra.mxu0 0.0
        %351 = vmatpush.msra.mxu0 0.0
        %352 = vmatpush.msra.mxu0 %v330
        %353 = vmatpush.msra.mxu0 %v329
        %354 = vmatmul.f32.gmra.mxu0 %v333
        %v355 = vpop.f32.mrf.mxu0
        %v356 = vadd.f32 0.0, %v355
        %357 = vmatmul.f32.gmra.mxu0 %v336
        %v358 = vpop.f32.mrf.mxu0
        %v359 = vadd.f32 0.0, %v358
        %360 = vdwg.mxu0
        %v361 = vld [vmem:[#allocation7] sm:$0xff]
        %v362 = vld [vmem:[#allocation7 + $0x8] sm:$0xff]
        %v363 = vld [vmem:[%s3] sm:$0xff]
        %v364 = vld [vmem:[%s3 + $0x8] sm:$0xff]
        %v365 = vld [vmem:[%s287] sm:$0xff]
        %vm366 = vcmask 64512
        %v368 = vsel %vm366, %v363, 0
        %v371 = vsel %vm366, %v364, 0
        %373 = vmatpush.msra.mxu0 0.0
        %374 = vmatpush.msra.mxu0 0.0
        %375 = vmatpush.msra.mxu0 0.0
        %376 = vmatpush.msra.mxu0 0.0
        %377 = vmatpush.msra.mxu0 0.0
        %378 = vmatpush.msra.mxu0 0.0
        %379 = vmatpush.msra.mxu0 0.0
        %380 = vmatpush.msra.mxu0 0.0
        %381 = vmatpush.msra.mxu0 0.0
        %382 = vmatpush.msra.mxu0 0.0
        %383 = vmatpush.msra.mxu0 0.0
        %384 = vmatpush.msra.mxu0 0.0
        %385 = vmatpush.msra.mxu0 0.0
        %386 = vmatpush.msra.mxu0 0.0
        %387 = vmatpush.msra.mxu0 0.0
        %388 = vmatpush.msra.mxu0 %v365
        %389 = vmatmul.f32.gmra.mxu0 %v368
        %v390 = vpop.f32.mrf.mxu0
        %v391 = vadd.f32 0.0, %v390
        %392 = vmatmul.f32.gmra.mxu0 %v371
        %v393 = vpop.f32.mrf.mxu0
        %v394 = vadd.f32 0.0, %v393
        %395 = vdwg.mxu0
        %v396 = vld [vmem:[%s5] sm:$0xff]
        %v398 = vsel %vm366, %v391, 0
        %v401 = vsel %vm366, %v394, 0
        %403 = vmatpush.msra.mxu0 0.0
        %404 = vmatpush.msra.mxu0 0.0
        %405 = vmatpush.msra.mxu0 0.0
        %406 = vmatpush.msra.mxu0 0.0
        %407 = vmatpush.msra.mxu0 0.0
        %408 = vmatpush.msra.mxu0 0.0
        %409 = vmatpush.msra.mxu0 0.0
        %410 = vmatpush.msra.mxu0 0.0
        %411 = vmatpush.msra.mxu0 0.0
        %412 = vmatpush.msra.mxu0 0.0
        %413 = vmatpush.msra.mxu0 0.0
        %414 = vmatpush.msra.mxu0 0.0
        %415 = vmatpush.msra.mxu0 0.0
        %416 = vmatpush.msra.mxu0 0.0
        %417 = vmatpush.msra.mxu0 0.0
        %418 = vmatpush.msra.mxu0 %v396
        %419 = vmatmul.f32.gmra.mxu0 %v398
        %v420 = vpop.f32.mrf.mxu0
        %v421 = vadd.f32 0.0, %v420
        %422 = vmatmul.f32.gmra.mxu0 %v401
        %v423 = vpop.f32.mrf.mxu0
        %v424 = vadd.f32 0.0, %v423
        %425 = vdwg.mxu0
        %v427 = vsel %vm331, %v356, 0
        %v430 = vsel %vm331, %v359, 0
        %432 = vmatpush.msra.mxu0 0.0
        %433 = vmatpush.msra.mxu0 0.0
        %434 = vmatpush.msra.mxu0 0.0
        %435 = vmatpush.msra.mxu0 0.0
        %436 = vmatpush.msra.mxu0 0.0
        %437 = vmatpush.msra.mxu0 0.0
        %438 = vmatpush.msra.mxu0 0.0
        %439 = vmatpush.msra.mxu0 0.0
        %440 = vmatpush.msra.mxu0 0.0
        %441 = vmatpush.msra.mxu0 0.0
        %442 = vmatpush.msra.mxu0 0.0
        %443 = vmatpush.msra.mxu0 0.0
        %444 = vmatpush.msra.mxu0 0.0
        %445 = vmatpush.msra.mxu0 0.0
        %446 = vmatpush.msra.mxu0 %v362
        %447 = vmatpush.msra.mxu0 %v361
        %448 = vmatmul.f32.gmra.mxu0 %v427
        %v449 = vpop.f32.mrf.mxu0
        %v450 = vadd.f32 %v421, %v449
        %451 = vmatmul.f32.gmra.mxu0 %v430
        %v452 = vpop.f32.mrf.mxu0
        %v453 = vadd.f32 %v424, %v452
        %454 = vdwg.mxu0
        %455 = vst.msk [vmem:[%s326] sm:$0xff] %vm331, %v450
        %456 = vst.msk [vmem:[%s326 + $0x8] sm:$0xff] %vm331, %v453
        %s457 = sand.u32 %s170, 1
        %s458 = scalar_lea.sflag [#allocation4], %s457
        %s459 = sand.u32 %s170, 1
        %s460 = smul.addr %s459, 16
        %s461 = scalar_lea.vmem [#allocation8], %s460
        // Predicated region
        $region57: #{tpu_custom_call.1} parent=43 // pred_check
          %p462 = pneg %p180
        $region58: #{tpu_custom_call.1} parent=43 // pred_check_branch
          %464 = sbr.rel (%p462) target = $region60
        $region59: #{tpu_custom_call.1} parent=43 // pred_region
          %466 = vsyncadd %s458, 0
          %s467 = smul.addr %s26, 2
          %s468 = smul.addr %s467, 8
          %s469 = scalar_lea.hbm %s6, %s468
          %s470 = sshll.u32 %s461, 4
          %s471 = int_to_ptr.vmem [resolvable:$true] %s470
          %s472 = sshll.u32 %s469, 4
          %s473 = int_to_ptr.hbm [resolvable:$true] %s472
          %478 = dma.vmem_to_hbm [thread:$0]  %s471, 256, %s473, %s458, 128, 128, 8
        $region60: #{tpu_custom_call.1} parent=43 // pred_fallthru
          _
      $region44: #{tpu_custom_call.1} parent=5 // pred_fallthru
        _
      %p479 = scmp.le.s32.totalorder 2, %s21
      // Predicated region
      $region61: #{tpu_custom_call.1} parent=5 // pred_check
        %p480 = pneg %p479
      $region62: #{tpu_custom_call.1} parent=5 // pred_check_branch
        %482 = sbr.rel (%p480) target = $region64
      $region63: #{tpu_custom_call.1} parent=5 // pred_region
        %s483 = ssub.s32 %s21, 2
        // Predicated region
        $region65: #{tpu_custom_call.1} parent=63 // pred_check
          %p484 = pneg %p186
        $region66: #{tpu_custom_call.1} parent=63 // pred_check_branch
          %486 = sbr.rel (%p484) target = $region68
        $region67: #{tpu_custom_call.1} parent=63 // pred_region
          %s487 = sand.u32 %s171, 1
          %s488 = scalar_lea.sflag [#allocation4], %s487
          %s489 = sand.u32 %s171, 1
          %s490 = smul.addr %s489, 16
          %s491 = scalar_lea.vmem [#allocation8], %s490
          %493 = dma.done %s488, 256
        $region68: #{tpu_custom_call.1} parent=63 // pred_fallthru
          _
      $region64: #{tpu_custom_call.1} parent=5 // pred_fallthru
        _
    $region6: #{tpu_custom_call.1} parent=1 // loop_footer
      %s25 = sadd.s32 1, %s21
    $region7: #{tpu_custom_call.1} parent=1 // loop_footer_branch
      %20 = sbr.rel target = $region3
    $region8: #{tpu_custom_call.1} parent=1 // loop_exit
      _
    %494 = vsyncpa [#allocation3], 1
    %s495 = scalar_lea.sflag [#allocation3], 1
    %496 = vsyncpa %s495, 1
    %497 = vsyncpa [#allocation6], 1
    %s498 = scalar_lea.sflag [#allocation6], 1
    %499 = vsyncpa %s498, 1
    %500 = vsyncpa [#allocation4], 1
    %s501 = scalar_lea.sflag [#allocation4], 1
    %502 = vsyncpa %s501, 1

</llo_original>
